<compile_context>
chip_gen: v5e
topology: v5e:2x2
jax: 0.10.0
libtpu: 0.0.40
codegen_flags: <defaults>
</compile_context>

<pallas_src>
import functools

import jax
import jax.numpy as jnp
from jax.experimental import pallas as pl
from jax.experimental.pallas import tpu as pltpu

_LANE = 128
_SUBLANE = 8


def _cdiv(a: int, b: int) -> int:
    return -(-a // b)


def _choose_tiles(n_rows: int, num_classes: int, itemsize: int):
    """Pick (row tile TN, class chunk CC) from a conservative VMEM budget."""
    # Per-tile logits budget (single buffer, native dtype). Small enough that
    # double-buffered input + per-chunk f32 temporaries stay well inside v7x's
    # 64 MiB/TC VMEM (and trivially inside v5e/v6e's 128 MiB).
    tile_budget = 2 << 20
    if num_classes * _LANE * itemsize <= tile_budget:
        c_chunk = num_classes            # keep the class axis whole
    else:
        c_chunk = 2048                   # multiple of 128; online-LSE over chunks

    rows = tile_budget // (c_chunk * itemsize)
    if rows >= _LANE:
        tn = min(1024, (rows // _LANE) * _LANE)
    else:
        tn = max(_SUBLANE, (rows // _SUBLANE) * _SUBLANE)

    if n_rows < _SUBLANE:
        # Block first dim must be a multiple of 8 or equal to the full dim.
        return n_rows, c_chunk

    # Don't make the row tile bigger than the (rounded-down) row count.
    tn = min(tn, max(_SUBLANE, (n_rows // _SUBLANE) * _SUBLANE))
    # Ensure >= 2 row tiles when possible so both v7x TensorCores get work.
    while tn > _SUBLANE and _cdiv(n_rows, tn) < 2:
        tn = max(_SUBLANE, (tn // 2 // _SUBLANE) * _SUBLANE)
    return tn, c_chunk


def _make_nll_kernel(label_smoothing: float, num_classes: int,
                     n_rows: int, tn: int, c_chunk: int):
    use_smoothing = label_smoothing > 0.0
    smooth_per_class = label_smoothing / float(num_classes)
    n_c_blocks = _cdiv(num_classes, c_chunk)
    ragged_c = (num_classes % c_chunk) != 0
    ragged_n = (n_rows % tn) != 0

    def kernel(logits_ref, side_ref, out_ref, m_sc, l_sc, tl_sc, sx_sc):
        # logits_ref: (TN, CC) native dtype     (CC = c_chunk)
        # side_ref:   (TN, 2) f32, col 0 = target index, col 1 = mask
        # out_ref:    (TN, 1) f32 per-token masked NLL
        # m/l/tl/sx:  (TN, 1) f32 online-LSE / target-logit / sum_x accumulators
        i = pl.program_id(0)
        k = pl.program_id(1)

        @pl.when(k == 0)
        def _init():
            m_sc[...] = jnp.full_like(m_sc, -jnp.inf)
            l_sc[...] = jnp.zeros_like(l_sc)
            tl_sc[...] = jnp.zeros_like(tl_sc)
            sx_sc[...] = jnp.zeros_like(sx_sc)

        x = logits_ref[...]                                         # (TN, CC)
        tgt = side_ref[:, 0:1].astype(jnp.int32)                    # (TN, 1)
        col = jax.lax.broadcasted_iota(jnp.int32, x.shape, 1) + k * c_chunk

        if ragged_c:
            lane_ok = col < num_classes
            x_for_max = jnp.where(lane_ok, x, float("-inf"))        # stays native
        else:
            x_for_max = x

        # Online logsumexp (running max + rescaled running sum of exp).
        chunk_max = jnp.max(x_for_max, axis=-1, keepdims=True).astype(jnp.float32)
        m_prev = m_sc[...]
        m_new = jnp.maximum(m_prev, chunk_max)

        xf = x.astype(jnp.float32)
        p = jnp.exp(xf - m_new)
        if ragged_c:
            p = jnp.where(lane_ok, p, 0.0)
        alpha = jnp.exp(m_prev - m_new)                             # 0 at k == 0
        l_sc[...] = alpha * l_sc[...] + jnp.sum(p, axis=-1, keepdims=True)
        m_sc[...] = m_new

        # Target logit via select-sum (no one-hot multiply, no dynamic gather).
        # Sum is exact: at most one nonzero per row; upcast only the result.
        tl_sc[...] = tl_sc[...] + jnp.sum(
            jnp.where(col == tgt, x, jnp.zeros_like(x)),
            axis=-1, keepdims=True).astype(jnp.float32)

        if use_smoothing:
            xs = jnp.where(lane_ok, xf, 0.0) if ragged_c else xf
            sx_sc[...] = sx_sc[...] + jnp.sum(xs, axis=-1, keepdims=True)

        @pl.when(k == n_c_blocks - 1)
        def _finalize():
            lse = m_sc[...] + jnp.log(l_sc[...])
            # -log_softmax(x)[t]              = lse - x[t]
            # -sum(log_softmax(x)*smoothed)   = lse - (1-ls)*x[t] - (ls/C)*sum(x)
            if use_smoothing:
                nll = (lse - (1.0 - label_smoothing) * tl_sc[...]
                       - smooth_per_class * sx_sc[...])
            else:
                nll = lse - tl_sc[...]
            msk = side_ref[:, 1:2]                                  # (TN, 1) f32
            loss = nll * msk                                        # faithful to torch: loss * mask
            if ragged_n:
                row = jax.lax.broadcasted_iota(jnp.int32, (tn, 1), 0) + i * tn
                loss = jnp.where(row < n_rows, loss, 0.0)           # kill garbage tail rows
            out_ref[...] = loss

    return kernel


@functools.partial(jax.jit, static_argnames=("label_smoothing", "reduce"))
def sequence_cross_entropy_with_logits(logits, targets, mask,
                                       label_smoothing=-1.0, reduce=None):
    B, S, C = logits.shape
    N = B * S

    # Stream logits in their native dtype (e.g. bf16); upcast happens in-kernel.
    logits_flat = logits.reshape(N, C)

    # Pack targets + mask into one (N, 2) f32 side array -> one small side DMA
    # per grid step. (f32 represents class indices exactly for C < 2**24.)
    side = jnp.stack(
        [targets.reshape(N).astype(jnp.float32),
         mask.reshape(N).astype(jnp.float32)], axis=-1)             # (N, 2)

    itemsize = jnp.dtype(logits.dtype).itemsize
    TN, CC = _choose_tiles(N, C, itemsize)
    n_row_tiles = _cdiv(N, TN)
    n_c_tiles = _cdiv(C, CC)

    kernel = _make_nll_kernel(float(label_smoothing), C, N, TN, CC)

    # Double-buffered logits tile + headroom for in-kernel f32 temporaries;
    # capped at 48 MiB so it also fits v7x's 64 MiB/TC.
    vmem_est = 2 * TN * CC * itemsize + 4 * TN * CC * 4 + (4 << 20)
    vmem_limit = int(min(max(vmem_est, 32 << 20), 48 << 20))

    out = pl.pallas_call(
        kernel,
        out_shape=jax.ShapeDtypeStruct((N, 1), jnp.float32),
        grid_spec=pltpu.PrefetchScalarGridSpec(
            num_scalar_prefetch=0,
            grid=(n_row_tiles, n_c_tiles),
            in_specs=[
                pl.BlockSpec((TN, CC), lambda i, k: (i, k)),
                pl.BlockSpec((TN, 2), lambda i, k: (i, 0)),
            ],
            out_specs=pl.BlockSpec((TN, 1), lambda i, k: (i, 0)),
            scratch_shapes=[
                pltpu.VMEM((TN, 1), jnp.float32),   # running max m
                pltpu.VMEM((TN, 1), jnp.float32),   # running sumexp l
                pltpu.VMEM((TN, 1), jnp.float32),   # target-logit accumulator
                pltpu.VMEM((TN, 1), jnp.float32),   # sum_x accumulator (smoothing)
            ],
        ),
        compiler_params=pltpu.CompilerParams(
            dimension_semantics=("parallel", "arbitrary"),
            vmem_limit_bytes=vmem_limit),
    )(logits_flat, side)

    loss = out[:, 0].reshape(B, S)

    if reduce:
        loss = loss.sum(axis=1) / (mask.astype(jnp.float32).sum(axis=1) + 1e-13)
        if reduce == "batch":
            loss = loss.mean()
    return loss


class SequenceCrossEntropyLoss:
    """JAX/Pallas equivalent of the PyTorch SequenceCrossEntropyLoss module."""

    def __call__(self, logits, targets, mask, label_smoothing=-1, reduce=None):
        return sequence_cross_entropy_with_logits(
            logits, targets, mask, label_smoothing=label_smoothing, reduce=reduce)


def _reference(logits, targets, mask, label_smoothing, reduce):
    # pure-JAX reference for correctness checking
    B, S, C = logits.shape
    lp = jax.nn.log_softmax(logits.reshape(-1, C).astype(jnp.float32), axis=-1)
    t = targets.reshape(-1).astype(jnp.int32)
    if label_smoothing > 0.0:
        sv = label_smoothing / float(C)
        oh = jax.nn.one_hot(t, C, dtype=jnp.float32) * (1.0 - label_smoothing) + sv
        nll = -(lp * oh).sum(-1)
    else:
        nll = -jnp.take_along_axis(lp, t[:, None], axis=1)[:, 0]
    loss = nll.reshape(B, S) * mask.astype(jnp.float32)
    if reduce:
        loss = loss.sum(1) / (mask.astype(jnp.float32).sum(1) + 1e-13)
        if reduce == "batch":
            loss = loss.mean()
    return loss


if __name__ == "__main__":
    key = jax.random.PRNGKey(0)
    k1, k2, k3, k4, k5, k6 = jax.random.split(key, 6)

    loss_fn = SequenceCrossEntropyLoss()

    # --- small case (single C block, two row tiles) ---
    B, S, C = 2, 8, 32
    logits = jax.random.normal(k1, (B, S, C), dtype=jnp.float32)
    targets = jax.random.randint(k2, (B, S), 0, C, dtype=jnp.int32)
    mask = jnp.ones((B, S), dtype=jnp.float32).at[1, -2:].set(0.0)

    out_none = jax.block_until_ready(loss_fn(logits, targets, mask))
    out_sent = jax.block_until_ready(
        loss_fn(logits, targets, mask, label_smoothing=0.1, reduce="sentence"))
    out_batch = jax.block_until_ready(
        loss_fn(logits, targets, mask, label_smoothing=-1, reduce="batch"))

    assert out_none.shape == (B, S)
    assert out_sent.shape == (B,)
    assert out_batch.shape == ()
    assert jnp.allclose(out_none, _reference(logits, targets, mask, -1.0, None),
                        atol=1e-5, rtol=1e-5)
    assert jnp.allclose(out_sent, _reference(logits, targets, mask, 0.1, "sentence"),
                        atol=1e-5, rtol=1e-5)
    assert jnp.allclose(out_batch, _reference(logits, targets, mask, -1.0, "batch"),
                        atol=1e-5, rtol=1e-5)

    # --- ragged-rows case (no padding: tail masked in-kernel), bf16 logits ---
    B2, S2, C2 = 4, 300, 32
    logits2 = jax.random.normal(k3, (B2, S2, C2), dtype=jnp.float32).astype(jnp.bfloat16)
    targets2 = jax.random.randint(k4, (B2, S2), 0, C2, dtype=jnp.int32)
    mask2 = jnp.ones((B2, S2), dtype=jnp.float32).at[:, -7:].set(0.0)

    out2 = jax.block_until_ready(loss_fn(logits2, targets2, mask2))
    ref2 = _reference(logits2, targets2, mask2, -1.0, None)
    assert out2.shape == (B2, S2)
    assert jnp.allclose(out2, ref2, atol=1e-4, rtol=1e-4)

    out2s = jax.block_until_ready(
        loss_fn(logits2, targets2, mask2, label_smoothing=0.1, reduce="batch"))
    ref2s = _reference(logits2, targets2, mask2, 0.1, "batch")
    assert jnp.allclose(out2s, ref2s, atol=1e-4, rtol=1e-4)

    # --- large-vocab case (exercises the C-chunked online-LSE path, ragged C) ---
    B3, S3, C3 = 2, 64, 5000
    logits3 = jax.random.normal(k5, (B3, S3, C3), dtype=jnp.float32)
    targets3 = jax.random.randint(k6, (B3, S3), 0, C3, dtype=jnp.int32)
    mask3 = jnp.ones((B3, S3), dtype=jnp.float32).at[0, -3:].set(0.0)

    out3 = jax.block_until_ready(loss_fn(logits3, targets3, mask3))
    ref3 = _reference(logits3, targets3, mask3, -1.0, None)
    assert out3.shape == (B3, S3)
    assert jnp.allclose(out3, ref3, atol=1e-4, rtol=1e-4)

    out3s = jax.block_until_ready(
        loss_fn(logits3, targets3, mask3, label_smoothing=0.1, reduce="sentence"))
    ref3s = _reference(logits3, targets3, mask3, 0.1, "sentence")
    assert jnp.allclose(out3s, ref3s, atol=1e-4, rtol=1e-4)

    print("KERNEL_OK")
</pallas_src>

<mosaic_0001>
module attributes {stable_mosaic.version = 11 : i64} {
  func.func @kernel(%arg0: i32, %arg1: i32, %arg2: memref<8x32xf32, #tpu.memory_space<vmem>>, %arg3: memref<8x2xf32, #tpu.memory_space<vmem>>, %arg4: memref<8x1xf32, #tpu.memory_space<vmem>>, %arg5: memref<8x1xf32, #tpu.memory_space<vmem>>, %arg6: memref<8x1xf32, #tpu.memory_space<vmem>>, %arg7: memref<8x1xf32, #tpu.memory_space<vmem>>, %arg8: memref<8x1xf32, #tpu.memory_space<vmem>>) attributes {dimension_semantics = [#tpu.dimension_semantics<parallel>, #tpu.dimension_semantics<arbitrary>], iteration_bounds = array<i64: 2, 1>, scalar_prefetch = 0 : i64, scratch_operands = 4 : i64, tpu.core_type = #tpu.core_type<tc>, window_params = [{transform_indices = @transform_0, window_bounds = array<i64: 8, 32>}, {transform_indices = @transform_1, window_bounds = array<i64: 8, 2>}, {transform_indices = @transform_2, window_bounds = array<i64: 8, 1>}]} {
    %c0_i32 = arith.constant 0 : i32
    %0 = arith.cmpi eq, %arg1, %c0_i32 : i32
    %1 = arith.extui %0 : i1 to i32
    %c0_i32_0 = arith.constant 0 : i32
    %2 = arith.cmpi ne, %1, %c0_i32_0 : i32
    scf.if %2 {
      %cst_21 = arith.constant 0xFF800000 : f32
      %38 = vector.broadcast %cst_21 : f32 to vector<8x1xf32>
      %c0_22 = arith.constant 0 : index
      %c0_23 = arith.constant 0 : index
      %39 = vector.load %arg5[%c0_22, %c0_23] : memref<8x1xf32, #tpu.memory_space<vmem>>, vector<8x1xf32>
      tpu.vector_store %arg5[%c0_22, %c0_23], %38 {strides = array<i32>} : memref<8x1xf32, #tpu.memory_space<vmem>>, vector<8x1xf32>,
      %cst_24 = arith.constant 0.000000e+00 : f32
      %40 = vector.broadcast %cst_24 : f32 to vector<8x1xf32>
      %c0_25 = arith.constant 0 : index
      %c0_26 = arith.constant 0 : index
      %41 = vector.load %arg6[%c0_25, %c0_26] : memref<8x1xf32, #tpu.memory_space<vmem>>, vector<8x1xf32>
      tpu.vector_store %arg6[%c0_25, %c0_26], %40 {strides = array<i32>} : memref<8x1xf32, #tpu.memory_space<vmem>>, vector<8x1xf32>,
      %cst_27 = arith.constant 0.000000e+00 : f32
      %42 = vector.broadcast %cst_27 : f32 to vector<8x1xf32>
      %c0_28 = arith.constant 0 : index
      %c0_29 = arith.constant 0 : index
      %43 = vector.load %arg7[%c0_28, %c0_29] : memref<8x1xf32, #tpu.memory_space<vmem>>, vector<8x1xf32>
      tpu.vector_store %arg7[%c0_28, %c0_29], %42 {strides = array<i32>} : memref<8x1xf32, #tpu.memory_space<vmem>>, vector<8x1xf32>,
      %cst_30 = arith.constant 0.000000e+00 : f32
      %44 = vector.broadcast %cst_30 : f32 to vector<8x1xf32>
      %c0_31 = arith.constant 0 : index
      %c0_32 = arith.constant 0 : index
      %45 = vector.load %arg8[%c0_31, %c0_32] : memref<8x1xf32, #tpu.memory_space<vmem>>, vector<8x1xf32>
      tpu.vector_store %arg8[%c0_31, %c0_32], %44 {strides = array<i32>} : memref<8x1xf32, #tpu.memory_space<vmem>>, vector<8x1xf32>,
    } else {
    }
    %c0 = arith.constant 0 : index
    %c0_1 = arith.constant 0 : index
    %3 = vector.load %arg2[%c0, %c0_1] : memref<8x32xf32, #tpu.memory_space<vmem>>, vector<8x32xf32>
    %c0_2 = arith.constant 0 : index
    %c0_3 = arith.constant 0 : index
    %4 = vector.load %arg3[%c0_2, %c0_3] : memref<8x2xf32, #tpu.memory_space<vmem>>, vector<8x1xf32>
    %5 = arith.fptosi %4 : vector<8x1xf32> to vector<8x1xi32>
    %6 = tpu.iota {dimensions = array<i32: 1>} : vector<8x32xi32>
    %c32_i32 = arith.constant 32 : i32
    %7 = arith.muli %arg1, %c32_i32 : i32
    %8 = vector.broadcast %7 : i32 to vector<8x32xi32>
    %9 = arith.addi %6, %8 : vector<8x32xi32>
    %cst = arith.constant dense<0xFF800000> : vector<8xf32>
    %10 = vector.multi_reduction <maximumf>, %3, %cst [1] : vector<8x32xf32> to vector<8xf32>
    %11 = vector.shape_cast %10 : vector<8xf32> to vector<8x1xf32>
    %c0_4 = arith.constant 0 : index
    %c0_5 = arith.constant 0 : index
    %12 = vector.load %arg5[%c0_4, %c0_5] : memref<8x1xf32, #tpu.memory_space<vmem>>, vector<8x1xf32>
    %13 = arith.maximumf %12, %11 : vector<8x1xf32>
    %14 = vector.broadcast %13 : vector<8x1xf32> to vector<8x32xf32>
    %15 = arith.subf %3, %14 : vector<8x32xf32>
    %16 = math.exp %15 : vector<8x32xf32>
    %17 = arith.subf %12, %13 : vector<8x1xf32>
    %18 = math.exp %17 : vector<8x1xf32>
    %c0_6 = arith.constant 0 : index
    %c0_7 = arith.constant 0 : index
    %19 = vector.load %arg6[%c0_6, %c0_7] : memref<8x1xf32, #tpu.memory_space<vmem>>, vector<8x1xf32>
    %20 = arith.mulf %18, %19 : vector<8x1xf32>
    %cst_8 = arith.constant dense<0.000000e+00> : vector<8xf32>
    %21 = vector.multi_reduction <add>, %16, %cst_8 [1] : vector<8x32xf32> to vector<8xf32>
    %22 = vector.shape_cast %21 : vector<8xf32> to vector<8x1xf32>
    %23 = arith.addf %20, %22 : vector<8x1xf32>
    %c0_9 = arith.constant 0 : index
    %c0_10 = arith.constant 0 : index
    %24 = vector.load %arg6[%c0_9, %c0_10] : memref<8x1xf32, #tpu.memory_space<vmem>>, vector<8x1xf32>
    tpu.vector_store %arg6[%c0_9, %c0_10], %23 {strides = array<i32>} : memref<8x1xf32, #tpu.memory_space<vmem>>, vector<8x1xf32>,
    %c0_11 = arith.constant 0 : index
    %c0_12 = arith.constant 0 : index
    %25 = vector.load %arg5[%c0_11, %c0_12] : memref<8x1xf32, #tpu.memory_space<vmem>>, vector<8x1xf32>
    tpu.vector_store %arg5[%c0_11, %c0_12], %13 {strides = array<i32>} : memref<8x1xf32, #tpu.memory_space<vmem>>, vector<8x1xf32>,
    %c0_13 = arith.constant 0 : index
    %c0_14 = arith.constant 0 : index
    %26 = vector.load %arg7[%c0_13, %c0_14] : memref<8x1xf32, #tpu.memory_space<vmem>>, vector<8x1xf32>
    %27 = vector.broadcast %5 : vector<8x1xi32> to vector<8x32xi32>
    %28 = arith.cmpi eq, %9, %27 : vector<8x32xi32>
    %cst_15 = arith.constant 0.000000e+00 : f32
    %29 = vector.broadcast %cst_15 : f32 to vector<8x32xf32>
    %30 = arith.select %28, %3, %29 : vector<8x32xi1>, vector<8x32xf32>
    %cst_16 = arith.constant dense<0.000000e+00> : vector<8xf32>
    %31 = vector.multi_reduction <add>, %30, %cst_16 [1] : vector<8x32xf32> to vector<8xf32>
    %32 = vector.shape_cast %31 : vector<8xf32> to vector<8x1xf32>
    %33 = arith.addf %26, %32 : vector<8x1xf32>
    %c0_17 = arith.constant 0 : index
    %c0_18 = arith.constant 0 : index
    %34 = vector.load %arg7[%c0_17, %c0_18] : memref<8x1xf32, #tpu.memory_space<vmem>>, vector<8x1xf32>
    tpu.vector_store %arg7[%c0_17, %c0_18], %33 {strides = array<i32>} : memref<8x1xf32, #tpu.memory_space<vmem>>, vector<8x1xf32>,
    %c0_i32_19 = arith.constant 0 : i32
    %35 = arith.cmpi eq, %arg1, %c0_i32_19 : i32
    %36 = arith.extui %35 : i1 to i32
    %c0_i32_20 = arith.constant 0 : i32
    %37 = arith.cmpi ne, %36, %c0_i32_20 : i32
    scf.if %37 {
      %c0_21 = arith.constant 0 : index
      %c0_22 = arith.constant 0 : index
      %38 = vector.load %arg5[%c0_21, %c0_22] : memref<8x1xf32, #tpu.memory_space<vmem>>, vector<8x1xf32>
      %c0_23 = arith.constant 0 : index
      %c0_24 = arith.constant 0 : index
      %39 = vector.load %arg6[%c0_23, %c0_24] : memref<8x1xf32, #tpu.memory_space<vmem>>, vector<8x1xf32>
      %40 = math.log %39 : vector<8x1xf32>
      %41 = arith.addf %38, %40 : vector<8x1xf32>
      %c0_25 = arith.constant 0 : index
      %c0_26 = arith.constant 0 : index
      %42 = vector.load %arg7[%c0_25, %c0_26] : memref<8x1xf32, #tpu.memory_space<vmem>>, vector<8x1xf32>
      %43 = arith.subf %41, %42 : vector<8x1xf32>
      %c0_27 = arith.constant 0 : index
      %c1 = arith.constant 1 : index
      %44 = vector.load %arg3[%c0_27, %c1] : memref<8x2xf32, #tpu.memory_space<vmem>>, vector<8x1xf32>
      %45 = arith.mulf %43, %44 : vector<8x1xf32>
      %c0_28 = arith.constant 0 : index
      %c0_29 = arith.constant 0 : index
      %46 = vector.load %arg4[%c0_28, %c0_29] : memref<8x1xf32, #tpu.memory_space<vmem>>, vector<8x1xf32>
      tpu.vector_store %arg4[%c0_28, %c0_29], %45 {strides = array<i32>} : memref<8x1xf32, #tpu.memory_space<vmem>>, vector<8x1xf32>,
    } else {
    }
    return
  }
  func.func @transform_0(%arg0: i32, %arg1: i32) -> (i32, i32) {
    %c0_i32 = arith.constant 0 : i32
    return %arg0, %arg1 : i32, i32
  }
  func.func @transform_1(%arg0: i32, %arg1: i32) -> (i32, i32) {
    %c0_i32 = arith.constant 0 : i32
    %c0_i32_0 = arith.constant 0 : i32
    return %arg0, %c0_i32 : i32, i32
  }
  func.func @transform_2(%arg0: i32, %arg1: i32) -> (i32, i32) {
    %c0_i32 = arith.constant 0 : i32
    %c0_i32_0 = arith.constant 0 : i32
    return %arg0, %c0_i32 : i32, i32
  }
}

</mosaic_0001>

<llo_original>
// kernel: squeeze.1
$region0: #{squeeze.1}
  %s0 = inlined_call_operand.vmem [shape: f32[16], index: 0, kind: input, shape index: {}]
  %s1 = inlined_call_operand.hbm [shape: f32[2,8], index: 1, kind: output, shape index: {}]
  $region1: #{squeeze.1} parent=0
    #allocation0 [shape = 'u8[1024]{0}', space=vmem, size = 0x400, scoped, tag = 'operand span for operand 1']
    #allocation1 [shape = 's32[1]{0}', space=sflag, size = 0x4, scoped, tag = 'scoped memory for squeeze.1']
    #allocation2 [shape = 'u8[4096]{0}', space=vmem, size = 0x1000, scoped, tag = 'scoped mem for output reshape']
    #allocation3 [shape = 'u8[4096]{0}', space=vmem, size = 0x1000, scoped, tag = 'scoped mem for input reshape']
    %2 = vsyncpa [#allocation1], 0
    %s4 = ssub.s32 2, 1
    %v5 = vld [vmem:[%s0] sm:%s4]
    %6 = vst [vmem:[#allocation3] sm:%s4] %v5
    %v7 = vld [vmem:[#allocation3] sm:$0x1]
    %vm8 = vcmask 64512
    %9 = vst.msk [vmem:[#allocation2] sm:$0x1] %vm8, %v7
    %v10 = vld [vmem:[#allocation3] sm:$0x1]
    %11 = vrot.lane.b32.xlu0 %v10, 120
    %v12 = vpop.permute.xlu0 %11
    %vm13 = vcmask 64512
    %s14 = scalar_lea.vmem [#allocation2], 1
    %15 = vst.msk [vmem:[%s14] sm:$0x1] %vm13, %v12
    %s17 = ssub.s32 4, 1
    %v18 = vld [vmem:[#allocation2] sm:%s17]
    %s20 = ssub.s32 4, 1
    %21 = vst [vmem:[#allocation0] sm:%s20] %v18
    %23 = vsyncadd [#allocation1], 0
    %s25 = sshll.u32 [#allocation0], 4
    %s26 = int_to_ptr.vmem [resolvable:$true] %s25
    %s27 = sshll.u32 %s1, 4
    %s28 = int_to_ptr.hbm [resolvable:$true] %s27
    %30 = dma.vmem_to_hbm [thread:$0]  %s26, 32, %s28, [#allocation1]
    %32 = dma.done [#allocation1], 32
    %33 = vsyncpa [#allocation1], 1

// kernel: sequence_cross_entropy_with_logits.1
$region0: #{sequence_cross_entropy_with_logits.1}
  #allocation0 [shape = 'u32[]', space=smem, size = 0x4, offset = 0x4, fixed_abs, tag = 'smem constant byte address 0x4 - core index']
  #allocation1 [shape = 'u32[72,128]{1,0:T(1,128)}', space=vmem, size = 0x9000, scoped, tag = 'internal scratch']
  #allocation2 [shape = 'f32[8,1]{1,0:T(8,128)}', space=vmem, size = 0x1000, scoped, tag = 'scratch operand']
  #allocation3 [shape = 'f32[8,1]{1,0:T(8,128)}', space=vmem, size = 0x1000, scoped, tag = 'scratch operand']
  #allocation4 [shape = 'f32[8,1]{1,0:T(8,128)}', space=vmem, size = 0x1000, scoped, tag = 'scratch operand']
  #allocation5 [shape = 'f32[8,1]{1,0:T(8,128)}', space=vmem, size = 0x1000, scoped, tag = 'scratch operand']
  %s0 = inlined_call_operand.vmem [shape: f32[16,32], index: 0, kind: input, shape index: {}]
  %s1 = inlined_call_operand.vmem [shape: f32[16,2], index: 1, kind: input, shape index: {}]
  %s2 = inlined_call_operand.vmem [shape: f32[16,1], index: 2, kind: output, shape index: {}]
  %s3 = sld [smem:[#allocation0]]
  $region49: #{sequence_cross_entropy_with_logits.1} parent=0
    _
  %s5 = ssub.s32 1, %s3
  %s6 = scalar_select 0, %s5, %s3
  loop: start=0, step=1, limit=4
  $region2: #{sequence_cross_entropy_with_logits.1} parent=0 // loop_pre_header
    _
  $region3: #{sequence_cross_entropy_with_logits.1} parent=0 // loop_header
    %s8 = sphi 0, %s12
    %p9 = scmp.ge.s32.totalorder %s8, 4
    %s15 = sphi 0, %s27
    %s16 = sphi 0, %s23
    %s17 = sphi 0, %s15
    %s18 = sphi 0, %s16
    %s19 = sphi 0, %s17
    %s20 = sphi 0, %s18
    %s32 = sphi 0, %s34
    %s35 = sphi 0, %s32
    %s36 = sphi 0, %s35
    %s52 = sphi 0, %s36
    %s58 = sphi 0, %s60
    %s61 = sphi 0, %s58
    %s62 = sphi 0, %s61
    %s78 = sphi 0, %s62
    %s84 = sphi 0, %s86
    %s87 = sphi 0, %s84
    %s88 = sphi 0, %s87
    %s104 = sphi 0, %s88
  $region4: #{sequence_cross_entropy_with_logits.1} parent=0 // loop_header_branch
    %11 = sbr.rel (%p9) target = $region8
  $region5: #{sequence_cross_entropy_with_logits.1} parent=0 // loop_body
    %s13 = ssub.s32 %s8, 1
    %s14 = ssub.s32 %s8, 2
    %s21 = sadd.s32 1, %s16
    %p22 = scmp.ge.s32.totalorder %s21, 1
    %s23 = scalar_select %p22, 0, %s21
    %s24 = sadd.s32 1, %s15
    %s25 = scalar_select %p22, %s24, %s15
    %p26 = scmp.ge.s32.totalorder %s25, 2
    %s27 = scalar_select %p26, 0, %s25
    %s28 = ssub.s32 %s15, %s27
    %s29 = ssub.s32 %s16, %s23
    %s30 = sor.u32 %s28, %s29
    %p31 = scmp.eq.s32.totalorder %s30, 0
    %s33 = sadd.s32 %s32, 1
    %s34 = scalar_select %p31, %s32, %s33
    %p37 = pneg %p31
    %p38 = scmp.eq.s32.totalorder %s8, 1
    %p39 = por %p37, %p38
    %p40 = scmp.ne.s32.totalorder %s32, %s35
    %p41 = scmp.eq.s32.totalorder %s8, 0
    %p42 = por %p40, %p41
    %p43 = scmp.ne.s32.totalorder %s32, %s35
    %p44 = scmp.eq.s32.totalorder %s13, 1
    %p45 = por %p43, %p44
    %p46 = scmp.ne.s32.totalorder %s35, %s36
    %p47 = scmp.eq.s32.totalorder %s13, 0
    %p48 = por %p46, %p47
    %p49 = scmp.ne.s32.totalorder %s35, %s36
    %p50 = scmp.eq.s32.totalorder %s14, 1
    %p51 = por %p49, %p50
    %p53 = scmp.ne.s32.totalorder %s36, %s52
    %p54 = scmp.eq.s32.totalorder %s14, 0
    %p55 = por %p53, %p54
    %s56 = ssub.s32 %s15, %s27
    %p57 = scmp.eq.s32.totalorder %s56, 0
    %s59 = sadd.s32 %s58, 1
    %s60 = scalar_select %p57, %s58, %s59
    %p63 = pneg %p57
    %p64 = scmp.eq.s32.totalorder %s8, 1
    %p65 = por %p63, %p64
    %p66 = scmp.ne.s32.totalorder %s58, %s61
    %p67 = scmp.eq.s32.totalorder %s8, 0
    %p68 = por %p66, %p67
    %p69 = scmp.ne.s32.totalorder %s58, %s61
    %p70 = scmp.eq.s32.totalorder %s13, 1
    %p71 = por %p69, %p70
    %p72 = scmp.ne.s32.totalorder %s61, %s62
    %p73 = scmp.eq.s32.totalorder %s13, 0
    %p74 = por %p72, %p73
    %p75 = scmp.ne.s32.totalorder %s61, %s62
    %p76 = scmp.eq.s32.totalorder %s14, 1
    %p77 = por %p75, %p76
    %p79 = scmp.ne.s32.totalorder %s62, %s78
    %p80 = scmp.eq.s32.totalorder %s14, 0
    %p81 = por %p79, %p80
    %s82 = ssub.s32 %s15, %s27
    %p83 = scmp.eq.s32.totalorder %s82, 0
    %s85 = sadd.s32 %s84, 1
    %s86 = scalar_select %p83, %s84, %s85
    %p89 = pneg %p83
    %p90 = scmp.eq.s32.totalorder %s8, 1
    %p91 = por %p89, %p90
    %p92 = scmp.ne.s32.totalorder %s84, %s87
    %p93 = scmp.eq.s32.totalorder %s8, 0
    %p94 = por %p92, %p93
    %p95 = scmp.ne.s32.totalorder %s84, %s87
    %p96 = scmp.eq.s32.totalorder %s13, 1
    %p97 = por %p95, %p96
    %p98 = scmp.ne.s32.totalorder %s87, %s88
    %p99 = scmp.eq.s32.totalorder %s13, 0
    %p100 = por %p98, %p99
    %p101 = scmp.ne.s32.totalorder %s87, %s88
    %p102 = scmp.eq.s32.totalorder %s14, 1
    %p103 = por %p101, %p102
    %p105 = scmp.ne.s32.totalorder %s88, %s104
    %p106 = scmp.eq.s32.totalorder %s14, 0
    %p107 = por %p105, %p106
    %p108 = scmp.le.s32.totalorder 1, %s8
    %p109 = scmp.lt.s32.totalorder %s8, 3
    %p110 = pnand %p108, %p109
    %p111 = pneg %p110
    // Predicated region
    $region9: #{sequence_cross_entropy_with_logits.1} parent=5 // pred_check
      _
    $region10: #{sequence_cross_entropy_with_logits.1} parent=5 // pred_check_branch
      %113 = sbr.rel (%p110) target = $region12
    $region11: #{sequence_cross_entropy_with_logits.1} parent=5 // pred_region
      %s114 = ssub.s32 %s8, 1
    $region12: #{sequence_cross_entropy_with_logits.1} parent=5 // pred_fallthru
      _
    %p115 = scmp.lt.s32.totalorder %s8, 2
    // Predicated region
    $region13: #{sequence_cross_entropy_with_logits.1} parent=5 // pred_check
      %p116 = pneg %p115
    $region14: #{sequence_cross_entropy_with_logits.1} parent=5 // pred_check_branch
      %118 = sbr.rel (%p116) target = $region16
    $region15: #{sequence_cross_entropy_with_logits.1} parent=5 // pred_region
      // Predicated region
      $region17: #{sequence_cross_entropy_with_logits.1} parent=15 // pred_check
        %p119 = pneg %p42
      $region18: #{sequence_cross_entropy_with_logits.1} parent=15 // pred_check_branch
        %121 = sbr.rel (%p119) target = $region20
      $region19: #{sequence_cross_entropy_with_logits.1} parent=15 // pred_region
        %p122 = scmp.lt.s32.totalorder %s15, 1
        %s123 = scalar_select %p122, %s15, 1
        %p124 = scmp.lt.s32.totalorder %s16, 0
        %s125 = scalar_select %p124, %s16, 0
        %s126 = sadd.s32 %s125, %s123
        %s127 = smul.addr %s126, 8
        %s128 = scalar_lea.vmem %s0, %s127
      $region20: #{sequence_cross_entropy_with_logits.1} parent=15 // pred_fallthru
        _
      // Predicated region
      $region21: #{sequence_cross_entropy_with_logits.1} parent=15 // pred_check
        %p129 = pneg %p68
      $region22: #{sequence_cross_entropy_with_logits.1} parent=15 // pred_check_branch
        %131 = sbr.rel (%p129) target = $region24
      $region23: #{sequence_cross_entropy_with_logits.1} parent=15 // pred_region
        %p132 = scmp.lt.s32.totalorder %s15, 1
        %s133 = scalar_select %p132, %s15, 1
        %s134 = smul.addr %s133, 8
        %s135 = scalar_lea.vmem %s1, %s134
      $region24: #{sequence_cross_entropy_with_logits.1} parent=15 // pred_fallthru
        _
    $region16: #{sequence_cross_entropy_with_logits.1} parent=5 // pred_fallthru
      _
    %p136 = scmp.le.s32.totalorder 1, %s8
    %p137 = scmp.lt.s32.totalorder %s8, 3
    %p138 = pnand %p136, %p137
    %p139 = pneg %p138
    // Predicated region
    $region25: #{sequence_cross_entropy_with_logits.1} parent=5 // pred_check
      _
    $region26: #{sequence_cross_entropy_with_logits.1} parent=5 // pred_check_branch
      %141 = sbr.rel (%p138) target = $region28
    $region27: #{sequence_cross_entropy_with_logits.1} parent=5 // pred_region
      %s142 = ssub.s32 %s8, 1
      %p143 = scmp.lt.s32.totalorder %s17, 1
      %s144 = scalar_select %p143, %s17, 1
      %p145 = scmp.lt.s32.totalorder %s18, 0
      %s146 = scalar_select %p145, %s18, 0
      %s147 = sadd.s32 %s146, %s144
      %s148 = smul.addr %s147, 8
      %s149 = scalar_lea.vmem %s0, %s148
      %p150 = pneg %p48
      %p151 = pneg %p45
      %p152 = scmp.lt.s32.totalorder %s17, 1
      %s153 = scalar_select %p152, %s17, 1
      %s154 = smul.addr %s153, 8
      %s155 = scalar_lea.vmem %s1, %s154
      %p156 = pneg %p74
      %p157 = pneg %p71
      %p158 = pneg %p100
      %p159 = pneg %p97
      %p160 = scmp.lt.s32.totalorder %s17, 1
      %s161 = scalar_select %p160, %s17, 1
      %s162 = smul.addr %s161, 8
      %s163 = scalar_lea.vmem %s2, %s162
      %p164 = scmp.lt.s32.totalorder %s17, 1
      %s165 = scalar_select %p164, %s17, 1
      %p166 = scmp.lt.s32.totalorder %s18, 0
      %s167 = scalar_select %p166, %s18, 0
      %s168 = sadd.s32 %s167, %s165
      %s169 = smul.addr %s168, 8
      %s170 = scalar_lea.vmem %s0, %s169
      %p171 = scmp.lt.s32.totalorder %s17, 1
      %s172 = scalar_select %p171, %s17, 1
      %s173 = smul.addr %s172, 8
      %s174 = scalar_lea.vmem %s1, %s173
      %p175 = scmp.lt.s32.totalorder %s17, 1
      %s176 = scalar_select %p175, %s17, 1
      %s177 = smul.addr %s176, 8
      %s178 = scalar_lea.vmem %s2, %s177
      %p179 = scmp.eq.s32.totalorder %s18, 0
      // Predicated region
      $region29: #{sequence_cross_entropy_with_logits.1} parent=27 // pred_check
        %p180 = pneg %p179
      $region30: #{sequence_cross_entropy_with_logits.1} parent=27 // pred_check_branch
        %182 = sbr.rel (%p180) target = $region32
      $region31: #{sequence_cross_entropy_with_logits.1} parent=27 // pred_region
        %vm183 = vcmask 7168
        %184 = vst.msk [vmem:[#allocation2] sm:$0xff] %vm183, -inf
        %185 = vst.msk [vmem:[#allocation3] sm:$0xff] %vm183, 0.0
        %186 = vst.msk [vmem:[#allocation4] sm:$0xff] %vm183, 0.0
        %187 = vst.msk [vmem:[#allocation5] sm:$0xff] %vm183, 0.0
      $region32: #{sequence_cross_entropy_with_logits.1} parent=27 // pred_fallthru
        _
      %v188 = vld [vmem:[%s170] sm:$0xff]
      %v189 = vld [vmem:[%s174] sm:$0xff]
      %v190 = vcvt.f32.s32.to.zero.pseudo %v189
      %v191 = vlaneseq
      %v192 = vand.u32 %v191, 127
      %s193 = smul.u32 %s18, 32
      %v194 = vstv %s193
      %v195 = vadd.s32 %v192, %v194
      %vm196 = vcmask 261120
      %v197 = vsel %vm196, %v188, -inf
      %198 = vmax.xlane.f32.xlu0 %v197
      %v199 = vpop.xlane.xlu0 %198
      %v200 = vld [vmem:[#allocation2] sm:$0xff]
      %v201 = vmax.f32 %v200, %v199
      %203 = vset.pattern.permute.xlu0 0
      %204 = vperm.xlu0 %203, %v201
      %v205 = vpop.permute.xlu0 %204
      %v207 = vsub.f32 %v188, %v205
      %v208 = vmul.f32 %v207, 1.442695
      %v209 = vpow.pop %v208
      %v210 = vsub.f32 %v200, %v201
      %v211 = vmul.f32 %v210, 1.442695
      %v212 = vpow.pop %v211
      %v213 = vld [vmem:[#allocation3] sm:$0xff]
      %v214 = vmul.f32 %v212, %v213
      %v215 = vsel %vm196, %v209, 0.0
      %216 = vadd.xlane.f32.xlu0 %v215
      %v217 = vpop.xlane.xlu0 %216
      %v218 = vadd.f32 %v214, %v217
      %vm219 = vcmask 7168
      %220 = vst.msk [vmem:[#allocation3] sm:$0xff] %vm219, %v218
      %221 = vst.msk [vmem:[#allocation2] sm:$0xff] %vm219, %v201
      %v222 = vld [vmem:[#allocation4] sm:$0xff]
      %223 = vset.pattern.permute.xlu0 0
      %224 = vperm.xlu0 %223, %v190
      %v225 = vpop.permute.xlu0 %224
      %vm226 = vcmp.eq.s32.totalorder %v195, %v225
      %v227 = vsel %vm226, %v188, 0.0
      %v228 = vsel %vm196, %v227, 0.0
      %229 = vadd.xlane.f32.xlu0 %v228
      %v230 = vpop.xlane.xlu0 %229
      %v231 = vadd.f32 %v222, %v230
      %232 = vst.msk [vmem:[#allocation4] sm:$0xff] %vm219, %v231
      // Predicated region
      $region33: #{sequence_cross_entropy_with_logits.1} parent=27 // pred_check
        %p233 = pneg %p179
      $region34: #{sequence_cross_entropy_with_logits.1} parent=27 // pred_check_branch
        %235 = sbr.rel (%p233) target = $region36
      $region35: #{sequence_cross_entropy_with_logits.1} parent=27 // pred_region
        %v236 = vld [vmem:[#allocation2] sm:$0xff]
        %v237 = vld [vmem:[#allocation3] sm:$0xff]
        %v238 = vlog2.pop %v237
        %v239 = vmul.f32 %v238, 0.6931472
        %v240 = vadd.f32 %v236, %v239
        %v241 = vld [vmem:[#allocation4] sm:$0xff]
        %v242 = vsub.f32 %v240, %v241
        %v243 = vld [vmem:[%s174] sm:$0xff]
        %245 = vrot.lane.b32.xlu0 %v243, 127
        %v246 = vpop.permute.xlu0 %245
        %v248 = vmul.f32 %v242, %v246
        %249 = vst.msk [vmem:[%s178] sm:$0xff] %vm219, %v248
      $region36: #{sequence_cross_entropy_with_logits.1} parent=27 // pred_fallthru
        _
      %p250 = scmp.lt.s32.totalorder %s17, 1
      %s251 = scalar_select %p250, %s17, 1
      %s252 = smul.addr %s251, 8
      %s253 = scalar_lea.vmem %s2, %s252
      // Predicated region
      $region37: #{sequence_cross_entropy_with_logits.1} parent=27 // pred_check
        %p254 = pneg %p97
      $region38: #{sequence_cross_entropy_with_logits.1} parent=27 // pred_check_branch
        %256 = sbr.rel (%p254) target = $region40
      $region39: #{sequence_cross_entropy_with_logits.1} parent=27 // pred_region
        _
      $region40: #{sequence_cross_entropy_with_logits.1} parent=27 // pred_fallthru
        _
    $region28: #{sequence_cross_entropy_with_logits.1} parent=5 // pred_fallthru
      _
    %p257 = scmp.le.s32.totalorder 2, %s8
    // Predicated region
    $region41: #{sequence_cross_entropy_with_logits.1} parent=5 // pred_check
      %p258 = pneg %p257
    $region42: #{sequence_cross_entropy_with_logits.1} parent=5 // pred_check_branch
      %260 = sbr.rel (%p258) target = $region44
    $region43: #{sequence_cross_entropy_with_logits.1} parent=5 // pred_region
      %s261 = ssub.s32 %s8, 2
      // Predicated region
      $region45: #{sequence_cross_entropy_with_logits.1} parent=43 // pred_check
        %p262 = pneg %p103
      $region46: #{sequence_cross_entropy_with_logits.1} parent=43 // pred_check_branch
        %264 = sbr.rel (%p262) target = $region48
      $region47: #{sequence_cross_entropy_with_logits.1} parent=43 // pred_region
        %p265 = scmp.lt.s32.totalorder %s19, 1
        %s266 = scalar_select %p265, %s19, 1
        %s267 = smul.addr %s266, 8
        %s268 = scalar_lea.vmem %s2, %s267
      $region48: #{sequence_cross_entropy_with_logits.1} parent=43 // pred_fallthru
        _
    $region44: #{sequence_cross_entropy_with_logits.1} parent=5 // pred_fallthru
      _
  $region6: #{sequence_cross_entropy_with_logits.1} parent=0 // loop_footer
    %s12 = sadd.s32 1, %s8
  $region7: #{sequence_cross_entropy_with_logits.1} parent=0 // loop_footer_branch
    %7 = sbr.rel target = $region3
  $region8: #{sequence_cross_entropy_with_logits.1} parent=0 // loop_exit
    _

</llo_original>
